<compile_context>
chip_gen: v7x
topology: tpu7x:2x2x1
jax: 0.10.0
libtpu: 0.0.40
codegen_flags: <defaults>
</compile_context>

<pallas_src>
import jax
import jax.numpy as jnp
from jax.experimental import pallas as pl
from jax.experimental.pallas import tpu as pltpu


def _round_up(n, m):
    return ((n + m - 1) // m) * m


def _vmem_budget():
    """Per-generation scoped-VMEM budget (bytes) + physical capacity.

    v5e/v6e: 128 MiB physical -> ~96 MiB budget; v7x: 64 MiB -> 48 MiB.
    Falls back to the conservative v7x-sized budget if the query fails.
    """
    try:
        cap = int(getattr(pltpu.get_tpu_info(), "vmem_capacity_bytes", 0))
    except Exception:
        cap = 0
    if cap <= 0:
        cap = 64 * 1024 * 1024
    return min((cap * 3) // 4, 100 * 1024 * 1024), cap


def _word_predictor_kernel(x_ref, w1_ref, b1_ref, w2_ref, b2_ref, o_ref, acc_ref):
    # x_ref  : (tb, tk)       caller dtype (cast to bf16 here, right before the MXU)
    # w1_ref : (tk, latent)   bf16
    # b1_ref : (1, latent)    f32   (resident)
    # w2_ref : (1, latent)    f32   (fc2 weight as a row, resident)
    # b2_ref : (1,)           f32   (SMEM scalar)
    # o_ref  : (1, tb)        f32   (lane-dense output slab)
    # acc_ref: (tb, latent)   f32   (fc1 accumulator across the K grid axis)
    k = pl.program_id(1)

    @pl.when(k == 0)
    def _init():
        acc_ref[...] = jnp.zeros_like(acc_ref)

    acc_ref[...] += jnp.dot(
        x_ref[...].astype(jnp.bfloat16), w1_ref[...],
        preferred_element_type=jnp.float32)

    @pl.when(k == pl.num_programs(1) - 1)
    def _finalize():
        h = jnp.maximum(acc_ref[...] + b1_ref[...], 0.0)            # bias + ReLU (f32, VPU)
        # fc2 (out_features == 1): VPU multiply + XLU lane reduce instead of
        # an N=1 MXU matmul (no 1-column drain; MXU stays free).
        y = jnp.sum(h * w2_ref[...], axis=-1, keepdims=True)        # (tb, 1)
        # Lane-dense epilogue: transpose FIRST so the bias add + sigmoid run
        # on tb/128 full vregs instead of tb/8 one-lane vregs, then a
        # full-lane store.
        y_row = jnp.transpose(y) + b2_ref[0]                        # (1, tb)
        # Exact sigmoid via the tanh identity: a single EUP op.
        o_ref[...] = jnp.tanh(0.5 * y_row) * 0.5 + 0.5


def word_predictor(x, w1, b1, w2, b2, *, tb=None, tk=None):
    """x: (B, input_dim). w1: (input_dim, latent), b1: (latent,),
    w2: (latent, 1), b2: (1,).  Returns (B, 1) float32.

    x is streamed in the caller's dtype (keep it bf16 upstream for the best
    HBM roofline); the bf16 cast for the MXU happens in-kernel.
    """
    B, input_dim = x.shape
    latent = w1.shape[1]
    x_itemsize = jnp.dtype(x.dtype).itemsize

    vmem_limit, vmem_cap = _vmem_budget()
    small_vmem = vmem_cap <= 96 * 1024 * 1024    # v7x-like: 64 MiB VMEM, ~3.2 TB/s HBM

    # ---- K (input_dim) tiling: keep w1 resident unless it eats the budget ----
    w1_budget = (vmem_limit * 3) // 5
    if tk is None:
        if input_dim * latent * 2 <= w1_budget:
            tk = input_dim                        # fully resident bf16 fc1 weight
        else:
            # K-tiled fallback (large w1; matters most on v7x's 64 MiB VMEM).
            # The reduction must never read garbage, so tk has to divide
            # input_dim exactly.
            if input_dim % 128 != 0:
                # Rare: zero-pad the contraction axis (zeros are exact; costs
                # one extra pass over x, only in this huge-weight edge case).
                pad = _round_up(input_dim, 128) - input_dim
                x = jnp.pad(x, ((0, 0), (0, pad)))
                w1 = jnp.pad(w1, ((0, pad), (0, 0)))
                input_dim += pad
            tk = 128
            for mult in range(input_dim // 128, 0, -1):
                cand = 128 * mult
                if input_dim % cand == 0 and 2 * cand * latent * 2 <= w1_budget:
                    tk = cand
                    break
    else:
        tk = min(int(tk), input_dim)
        if tk < input_dim and input_dim % tk != 0:
            raise ValueError("tk must divide input_dim exactly")
    num_k = pl.cdiv(input_dim, tk)

    # ---- batch tiling: size tb from the VMEM left after resident weights ----
    if num_k == 1:
        w_resident = input_dim * latent * 2       # single-buffered bf16 w1
    else:
        w_resident = 2 * tk * latent * 2          # double-buffered bf16 K tiles
    w_resident += 2 * latent * 4                  # b1 + w2 rows (f32)
    avail = max(vmem_limit - w_resident - (2 << 20), 2 << 20)
    per_row = 2 * tk * x_itemsize + latent * 4 + 8   # x (double-buffered) + f32 acc + out
    tb_cap = max(avail // per_row, 8)

    if tb is None:
        # v7x: bigger tiles to amortize ~0.35 us/step at 3.2 TB/s HBM;
        # v5e/v6e are already near roofline at 512 rows.
        tb = 1024 if small_vmem else 512
        if small_vmem and B >= 8 * 256:
            # keep >= ~8 batch blocks so both v7x TensorCores stay pipelined
            tb = min(tb, max(256, ((B // 8) // 128) * 128))
    tb = max(8, min(int(tb), int(tb_cap)))
    if B <= tb:
        tb = B                                    # single (full) batch block
    else:
        tb = max(128, (tb // 128) * 128)          # lane-dense (1, tb) output tiles
    num_b = pl.cdiv(B, tb)

    # Weights: bf16 for the MXU operand (halves HBM + VMEM for w1); f32 rows
    # for the bias / fc2 epilogue; scalar fc2 bias in SMEM.
    w1_c = w1.astype(jnp.bfloat16)
    b1_2d = b1.reshape(1, latent).astype(jnp.float32)
    w2_row = w2.reshape(1, latent).astype(jnp.float32)
    b2_1d = b2.reshape(1).astype(jnp.float32)

    cost = pl.CostEstimate(
        flops=2 * B * input_dim * latent + 2 * B * latent,
        transcendentals=B,
        bytes_accessed=(B * input_dim * x_itemsize + input_dim * latent * 2
                        + 2 * latent * 4 + B * 4),
    )

    def _run(single_buffer_weights):
        def _spec(shape, index_map, grid_invariant):
            if single_buffer_weights and grid_invariant:
                # Grid-invariant input: one VMEM buffer instead of the
                # default double-buffer (halves resident-weight footprint).
                return pl.BlockSpec(shape, index_map, pipeline_mode=pl.Buffered(1))
            return pl.BlockSpec(shape, index_map)

        in_specs = [
            pl.BlockSpec((tb, tk), lambda i, k: (i, k)),             # x tile (caller dtype)
            _spec((tk, latent), lambda i, k: (k, 0), num_k == 1),    # w1
            _spec((1, latent), lambda i, k: (0, 0), True),           # b1 (resident)
            _spec((1, latent), lambda i, k: (0, 0), True),           # w2 row (resident)
            pl.BlockSpec(memory_space=pltpu.MemorySpace.SMEM),       # b2 scalar
        ]
        return pl.pallas_call(
            _word_predictor_kernel,
            out_shape=jax.ShapeDtypeStruct((1, B), jnp.float32),
            grid_spec=pltpu.PrefetchScalarGridSpec(
                num_scalar_prefetch=0,
                grid=(num_b, num_k),
                in_specs=in_specs,
                out_specs=pl.BlockSpec((1, tb), lambda i, k: (0, i)),  # lane-dense slab
                scratch_shapes=[pltpu.VMEM((tb, latent), jnp.float32)],
            ),
            compiler_params=pltpu.CompilerParams(
                dimension_semantics=("parallel", "arbitrary"),
                vmem_limit_bytes=int(vmem_limit),
            ),
            cost_estimate=cost,
        )(x, w1_c, b1_2d, w2_row, b2_1d)

    try:
        out_row = _run(True)
    except Exception:
        # pl.Buffered single-buffering not supported on this jax/backend
        # combo -> fall back to default double-buffered specs.
        out_row = _run(False)

    # (1, B) lane-dense slab -> (B, 1)
    return out_row.reshape(B, 1)


def init_params(key, input_dim, latent_dim):
    """Deterministic init mimicking nn.Linear default (uniform +-1/sqrt(fan_in)).
    Weights are stored pre-transposed: (in_features, out_features)."""
    k1, k2, k3, k4 = jax.random.split(key, 4)
    bound1 = 1.0 / (input_dim ** 0.5)
    bound2 = 1.0 / (latent_dim ** 0.5)
    w1 = jax.random.uniform(k1, (input_dim, latent_dim), jnp.float32, -bound1, bound1)
    b1 = jax.random.uniform(k2, (latent_dim,), jnp.float32, -bound1, bound1)
    w2 = jax.random.uniform(k3, (latent_dim, 1), jnp.float32, -bound2, bound2)
    b2 = jax.random.uniform(k4, (1,), jnp.float32, -bound2, bound2)
    return w1, b1, w2, b2


def reference(x, w1, b1, w2, b2):
    h = jnp.maximum(x @ w1 + b1, 0.0)
    return jax.nn.sigmoid(h @ w2 + b2)


if __name__ == "__main__":
    # Small config (single batch block, fully resident w1).
    batch, input_dim, latent_dim = 8, 32, 32
    key = jax.random.PRNGKey(0)
    kx, kp = jax.random.split(key)
    x = jax.random.normal(kx, (batch, input_dim), jnp.float32)
    w1, b1, w2, b2 = init_params(kp, input_dim, latent_dim)

    out = jax.block_until_ready(word_predictor(x, w1, b1, w2, b2))
    ref = reference(x, w1, b1, w2, b2)
    assert out.shape == (batch, 1)
    # bf16 fc1 inputs vs the pure-f32 reference.
    assert jnp.allclose(out, ref, atol=2e-2, rtol=0.0), "mismatch vs f32 reference"

    # Ragged batch, multi-block batch grid; no wrapper pad/cast -- the partial
    # tail block's garbage rows never reach the (1, B) output.
    batch2, in2, lat2 = 300, 160, 96
    kx2, kp2 = jax.random.split(jax.random.PRNGKey(1))
    x2 = jax.random.normal(kx2, (batch2, in2), jnp.float32)
    p2 = init_params(kp2, in2, lat2)
    out2 = jax.block_until_ready(word_predictor(x2, *p2, tb=128))
    ref2 = reference(x2, *p2)
    assert out2.shape == (batch2, 1)
    assert jnp.allclose(out2, ref2, atol=2e-2, rtol=0.0), "mismatch (tiled batch)"

    # K-tiled path (fc1 weight split over the contraction axis + f32 VMEM
    # accumulator, init/finalize via pl.when).
    batch3, in3, lat3 = 200, 384, 64
    kx3, kp3 = jax.random.split(jax.random.PRNGKey(2))
    x3 = jax.random.normal(kx3, (batch3, in3), jnp.float32)
    p3 = init_params(kp3, in3, lat3)
    out3 = jax.block_until_ready(word_predictor(x3, *p3, tb=128, tk=128))
    ref3 = reference(x3, *p3)
    assert out3.shape == (batch3, 1)
    assert jnp.allclose(out3, ref3, atol=2e-2, rtol=0.0), "mismatch (K-tiled)"

    print("KERNEL_OK")
</pallas_src>

<mosaic_0001>
module attributes {stable_mosaic.version = 11 : i64} {
  func.func @_word_predictor_kernel(%arg0: i32, %arg1: i32, %arg2: memref<8x32xf32, #tpu.memory_space<vmem>>, %arg3: memref<32x32xbf16, #tpu.memory_space<vmem>>, %arg4: memref<1x32xf32, #tpu.memory_space<vmem>>, %arg5: memref<1x32xf32, #tpu.memory_space<vmem>>, %arg6: memref<1xf32, #tpu.memory_space<smem>>, %arg7: memref<1x8xf32, #tpu.memory_space<vmem>>, %arg8: memref<8x32xf32, #tpu.memory_space<vmem>>) attributes {dimension_semantics = [#tpu.dimension_semantics<parallel>, #tpu.dimension_semantics<arbitrary>], iteration_bounds = array<i64: 1, 1>, scalar_prefetch = 0 : i64, scratch_operands = 1 : i64, tpu.core_type = #tpu.core_type<tc>, window_params = [{transform_indices = @transform_0, window_bounds = array<i64: 8, 32>}, {pipeline_mode = #tpu.pipeline_mode<synchronous>, transform_indices = @transform_1, window_bounds = array<i64: 32, 32>}, {pipeline_mode = #tpu.pipeline_mode<synchronous>, transform_indices = @transform_2, window_bounds = array<i64: 1, 32>}, {pipeline_mode = #tpu.pipeline_mode<synchronous>, transform_indices = @transform_3, window_bounds = array<i64: 1, 32>}, {transform_indices = @transform_4, window_bounds = array<i64: 1>}, {transform_indices = @transform_5, window_bounds = array<i64: 1, 8>}]} {
    %c0_i32 = arith.constant 0 : i32
    %0 = arith.cmpi eq, %arg1, %c0_i32 : i32
    %1 = arith.extui %0 : i1 to i32
    %c0_i32_0 = arith.constant 0 : i32
    %2 = arith.cmpi ne, %1, %c0_i32_0 : i32
    scf.if %2 {
      %cst_10 = arith.constant 0.000000e+00 : f32
      %13 = vector.broadcast %cst_10 : f32 to vector<8x32xf32>
      %c0_11 = arith.constant 0 : index
      %c0_12 = arith.constant 0 : index
      %14 = vector.load %arg8[%c0_11, %c0_12] : memref<8x32xf32, #tpu.memory_space<vmem>>, vector<8x32xf32>
      tpu.vector_store %arg8[%c0_11, %c0_12], %13 {strides = array<i32>} : memref<8x32xf32, #tpu.memory_space<vmem>>, vector<8x32xf32>,
    } else {
    }
    %c0 = arith.constant 0 : index
    %c0_1 = arith.constant 0 : index
    %3 = vector.load %arg8[%c0, %c0_1] : memref<8x32xf32, #tpu.memory_space<vmem>>, vector<8x32xf32>
    %c0_2 = arith.constant 0 : index
    %c0_3 = arith.constant 0 : index
    %4 = vector.load %arg2[%c0_2, %c0_3] : memref<8x32xf32, #tpu.memory_space<vmem>>, vector<8x32xf32>
    %5 = arith.truncf %4 : vector<8x32xf32> to vector<8x32xbf16>
    %c0_4 = arith.constant 0 : index
    %c0_5 = arith.constant 0 : index
    %6 = vector.load %arg3[%c0_4, %c0_5] : memref<32x32xbf16, #tpu.memory_space<vmem>>, vector<32x32xbf16>
    %cst = arith.constant dense<0.000000e+00> : vector<8x32xf32>
    %7 = tpu.matmul %5, %6, %cst {dimension_numbers = #tpu.dot_dimension_numbers<[1], [0], [0], [1], [0, 0, 1, 1], [], []>} : vector<8x32xbf16>, vector<32x32xbf16>, vector<8x32xf32> -> vector<8x32xf32>
    %8 = arith.addf %3, %7 : vector<8x32xf32>
    %c0_6 = arith.constant 0 : index
    %c0_7 = arith.constant 0 : index
    %9 = vector.load %arg8[%c0_6, %c0_7] : memref<8x32xf32, #tpu.memory_space<vmem>>, vector<8x32xf32>
    tpu.vector_store %arg8[%c0_6, %c0_7], %8 {strides = array<i32>} : memref<8x32xf32, #tpu.memory_space<vmem>>, vector<8x32xf32>,
    %c0_i32_8 = arith.constant 0 : i32
    %10 = arith.cmpi eq, %arg1, %c0_i32_8 : i32
    %11 = arith.extui %10 : i1 to i32
    %c0_i32_9 = arith.constant 0 : i32
    %12 = arith.cmpi ne, %11, %c0_i32_9 : i32
    scf.if %12 {
      %c0_10 = arith.constant 0 : index
      %c0_11 = arith.constant 0 : index
      %13 = vector.load %arg8[%c0_10, %c0_11] : memref<8x32xf32, #tpu.memory_space<vmem>>, vector<8x32xf32>
      %c0_12 = arith.constant 0 : index
      %c0_13 = arith.constant 0 : index
      %14 = vector.load %arg4[%c0_12, %c0_13] : memref<1x32xf32, #tpu.memory_space<vmem>>, vector<1x32xf32>
      %15 = vector.broadcast %14 : vector<1x32xf32> to vector<8x32xf32>
      %16 = arith.addf %13, %15 : vector<8x32xf32>
      %cst_14 = arith.constant 0.000000e+00 : f32
      %17 = vector.broadcast %cst_14 : f32 to vector<8x32xf32>
      %18 = arith.maximumf %16, %17 : vector<8x32xf32>
      %c0_15 = arith.constant 0 : index
      %c0_16 = arith.constant 0 : index
      %19 = vector.load %arg5[%c0_15, %c0_16] : memref<1x32xf32, #tpu.memory_space<vmem>>, vector<1x32xf32>
      %20 = vector.broadcast %19 : vector<1x32xf32> to vector<8x32xf32>
      %21 = arith.mulf %18, %20 : vector<8x32xf32>
      %cst_17 = arith.constant dense<0.000000e+00> : vector<8xf32>
      %22 = vector.multi_reduction <add>, %21, %cst_17 [1] : vector<8x32xf32> to vector<8xf32>
      %23 = vector.shape_cast %22 : vector<8xf32> to vector<8x1xf32>
      %24 = tpu.transpose %23, [1, 0] : vector<8x1xf32> -> vector<1x8xf32>
      %c0_18 = arith.constant 0 : index
      %25 = memref.load %arg6[%c0_18] : memref<1xf32, #tpu.memory_space<smem>>
      %26 = vector.broadcast %25 : f32 to vector<1x8xf32>
      %27 = arith.addf %24, %26 : vector<1x8xf32>
      %cst_19 = arith.constant 5.000000e-01 : f32
      %28 = vector.broadcast %cst_19 : f32 to vector<1x8xf32>
      %29 = arith.mulf %28, %27 : vector<1x8xf32>
      %30 = math.tanh %29 : vector<1x8xf32>
      %cst_20 = arith.constant 5.000000e-01 : f32
      %31 = vector.broadcast %cst_20 : f32 to vector<1x8xf32>
      %32 = arith.mulf %30, %31 : vector<1x8xf32>
      %cst_21 = arith.constant 5.000000e-01 : f32
      %33 = vector.broadcast %cst_21 : f32 to vector<1x8xf32>
      %34 = arith.addf %32, %33 : vector<1x8xf32>
      %c0_22 = arith.constant 0 : index
      %c0_23 = arith.constant 0 : index
      %35 = vector.load %arg7[%c0_22, %c0_23] : memref<1x8xf32, #tpu.memory_space<vmem>>, vector<1x8xf32>
      tpu.vector_store %arg7[%c0_22, %c0_23], %34 {strides = array<i32>} : memref<1x8xf32, #tpu.memory_space<vmem>>, vector<1x8xf32>,
    } else {
    }
    return
  }
  func.func @transform_0(%arg0: i32, %arg1: i32) -> (i32, i32) {
    %c0_i32 = arith.constant 0 : i32
    return %arg0, %arg1 : i32, i32
  }
  func.func @transform_1(%arg0: i32, %arg1: i32) -> (i32, i32) {
    %c0_i32 = arith.constant 0 : i32
    %c0_i32_0 = arith.constant 0 : i32
    return %arg1, %c0_i32 : i32, i32
  }
  func.func @transform_2(%arg0: i32, %arg1: i32) -> (i32, i32) {
    %c0_i32 = arith.constant 0 : i32
    %c0_i32_0 = arith.constant 0 : i32
    %c0_i32_1 = arith.constant 0 : i32
    return %c0_i32, %c0_i32_0 : i32, i32
  }
  func.func @transform_3(%arg0: i32, %arg1: i32) -> (i32, i32) {
    %c0_i32 = arith.constant 0 : i32
    %c0_i32_0 = arith.constant 0 : i32
    %c0_i32_1 = arith.constant 0 : i32
    return %c0_i32, %c0_i32_0 : i32, i32
  }
  func.func @transform_4(%arg0: i32, %arg1: i32) -> i32 {
    %c0_i32 = arith.constant 0 : i32
    %c0_i32_0 = arith.constant 0 : i32
    return %c0_i32 : i32
  }
  func.func @transform_5(%arg0: i32, %arg1: i32) -> (i32, i32) {
    %c0_i32 = arith.constant 0 : i32
    %c0_i32_0 = arith.constant 0 : i32
    return %c0_i32, %arg0 : i32, i32
  }
}

module attributes {stable_mosaic.version = 11 : i64} {
  func.func @_word_predictor_kernel(%arg0: i32, %arg1: i32, %arg2: memref<8x32xf32, #tpu.memory_space<vmem>>, %arg3: memref<32x32xbf16, #tpu.memory_space<vmem>>, %arg4: memref<1x32xf32, #tpu.memory_space<vmem>>, %arg5: memref<1x32xf32, #tpu.memory_space<vmem>>, %arg6: memref<1xf32, #tpu.memory_space<smem>>, %arg7: memref<1x8xf32, #tpu.memory_space<vmem>>, %arg8: memref<8x32xf32, #tpu.memory_space<vmem>>) attributes {dimension_semantics = [#tpu.dimension_semantics<parallel>, #tpu.dimension_semantics<arbitrary>], iteration_bounds = array<i64: 1, 1>, scalar_prefetch = 0 : i64, scratch_operands = 1 : i64, tpu.core_type = #tpu.core_type<tc>, window_params = [{transform_indices = @transform_0, window_bounds = array<i64: 8, 32>}, {transform_indices = @transform_1, window_bounds = array<i64: 32, 32>}, {pipeline_mode = #tpu.pipeline_mode<synchronous>, transform_indices = @transform_2, window_bounds = array<i64: 1, 32>}, {pipeline_mode = #tpu.pipeline_mode<synchronous>, transform_indices = @transform_3, window_bounds = array<i64: 1, 32>}, {transform_indices = @transform_4, window_bounds = array<i64: 1>}, {transform_indices = @transform_5, window_bounds = array<i64: 1, 8>}]} {
    %c0_i32 = arith.constant 0 : i32
    %0 = arith.cmpi eq, %arg1, %c0_i32 : i32
    %1 = arith.extui %0 : i1 to i32
    %c0_i32_0 = arith.constant 0 : i32
    %2 = arith.cmpi ne, %1, %c0_i32_0 : i32
    scf.if %2 {
      %cst_10 = arith.constant 0.000000e+00 : f32
      %13 = vector.broadcast %cst_10 : f32 to vector<8x32xf32>
      %c0_11 = arith.constant 0 : index
      %c0_12 = arith.constant 0 : index
      %14 = vector.load %arg8[%c0_11, %c0_12] : memref<8x32xf32, #tpu.memory_space<vmem>>, vector<8x32xf32>
      tpu.vector_store %arg8[%c0_11, %c0_12], %13 {strides = array<i32>} : memref<8x32xf32, #tpu.memory_space<vmem>>, vector<8x32xf32>,
    } else {
    }
    %c0 = arith.constant 0 : index
    %c0_1 = arith.constant 0 : index
    %3 = vector.load %arg8[%c0, %c0_1] : memref<8x32xf32, #tpu.memory_space<vmem>>, vector<8x32xf32>
    %c0_2 = arith.constant 0 : index
    %c0_3 = arith.constant 0 : index
    %4 = vector.load %arg2[%c0_2, %c0_3] : memref<8x32xf32, #tpu.memory_space<vmem>>, vector<8x32xf32>
    %5 = arith.truncf %4 : vector<8x32xf32> to vector<8x32xbf16>
    %c0_4 = arith.constant 0 : index
    %c0_5 = arith.constant 0 : index
    %6 = vector.load %arg3[%c0_4, %c0_5] : memref<32x32xbf16, #tpu.memory_space<vmem>>, vector<32x32xbf16>
    %cst = arith.constant dense<0.000000e+00> : vector<8x32xf32>
    %7 = tpu.matmul %5, %6, %cst {dimension_numbers = #tpu.dot_dimension_numbers<[1], [0], [0], [1], [0, 0, 1, 1], [], []>} : vector<8x32xbf16>, vector<32x32xbf16>, vector<8x32xf32> -> vector<8x32xf32>
    %8 = arith.addf %3, %7 : vector<8x32xf32>
    %c0_6 = arith.constant 0 : index
    %c0_7 = arith.constant 0 : index
    %9 = vector.load %arg8[%c0_6, %c0_7] : memref<8x32xf32, #tpu.memory_space<vmem>>, vector<8x32xf32>
    tpu.vector_store %arg8[%c0_6, %c0_7], %8 {strides = array<i32>} : memref<8x32xf32, #tpu.memory_space<vmem>>, vector<8x32xf32>,
    %c0_i32_8 = arith.constant 0 : i32
    %10 = arith.cmpi eq, %arg1, %c0_i32_8 : i32
    %11 = arith.extui %10 : i1 to i32
    %c0_i32_9 = arith.constant 0 : i32
    %12 = arith.cmpi ne, %11, %c0_i32_9 : i32
    scf.if %12 {
      %c0_10 = arith.constant 0 : index
      %c0_11 = arith.constant 0 : index
      %13 = vector.load %arg8[%c0_10, %c0_11] : memref<8x32xf32, #tpu.memory_space<vmem>>, vector<8x32xf32>
      %c0_12 = arith.constant 0 : index
      %c0_13 = arith.constant 0 : index
      %14 = vector.load %arg4[%c0_12, %c0_13] : memref<1x32xf32, #tpu.memory_space<vmem>>, vector<1x32xf32>
      %15 = vector.broadcast %14 : vector<1x32xf32> to vector<8x32xf32>
      %16 = arith.addf %13, %15 : vector<8x32xf32>
      %cst_14 = arith.constant 0.000000e+00 : f32
      %17 = vector.broadcast %cst_14 : f32 to vector<8x32xf32>
      %18 = arith.maximumf %16, %17 : vector<8x32xf32>
      %c0_15 = arith.constant 0 : index
      %c0_16 = arith.constant 0 : index
      %19 = vector.load %arg5[%c0_15, %c0_16] : memref<1x32xf32, #tpu.memory_space<vmem>>, vector<1x32xf32>
      %20 = vector.broadcast %19 : vector<1x32xf32> to vector<8x32xf32>
      %21 = arith.mulf %18, %20 : vector<8x32xf32>
      %cst_17 = arith.constant dense<0.000000e+00> : vector<8xf32>
      %22 = vector.multi_reduction <add>, %21, %cst_17 [1] : vector<8x32xf32> to vector<8xf32>
      %23 = vector.shape_cast %22 : vector<8xf32> to vector<8x1xf32>
      %24 = tpu.transpose %23, [1, 0] : vector<8x1xf32> -> vector<1x8xf32>
      %c0_18 = arith.constant 0 : index
      %25 = memref.load %arg6[%c0_18] : memref<1xf32, #tpu.memory_space<smem>>
      %26 = vector.broadcast %25 : f32 to vector<1x8xf32>
      %27 = arith.addf %24, %26 : vector<1x8xf32>
      %cst_19 = arith.constant 5.000000e-01 : f32
      %28 = vector.broadcast %cst_19 : f32 to vector<1x8xf32>
      %29 = arith.mulf %28, %27 : vector<1x8xf32>
      %30 = math.tanh %29 : vector<1x8xf32>
      %cst_20 = arith.constant 5.000000e-01 : f32
      %31 = vector.broadcast %cst_20 : f32 to vector<1x8xf32>
      %32 = arith.mulf %30, %31 : vector<1x8xf32>
      %cst_21 = arith.constant 5.000000e-01 : f32
      %33 = vector.broadcast %cst_21 : f32 to vector<1x8xf32>
      %34 = arith.addf %32, %33 : vector<1x8xf32>
      %c0_22 = arith.constant 0 : index
      %c0_23 = arith.constant 0 : index
      %35 = vector.load %arg7[%c0_22, %c0_23] : memref<1x8xf32, #tpu.memory_space<vmem>>, vector<1x8xf32>
      tpu.vector_store %arg7[%c0_22, %c0_23], %34 {strides = array<i32>} : memref<1x8xf32, #tpu.memory_space<vmem>>, vector<1x8xf32>,
    } else {
    }
    return
  }
  func.func @transform_0(%arg0: i32, %arg1: i32) -> (i32, i32) {
    %c0_i32 = arith.constant 0 : i32
    return %arg0, %arg1 : i32, i32
  }
  func.func @transform_1(%arg0: i32, %arg1: i32) -> (i32, i32) {
    %c0_i32 = arith.constant 0 : i32
    %c0_i32_0 = arith.constant 0 : i32
    return %arg1, %c0_i32 : i32, i32
  }
  func.func @transform_2(%arg0: i32, %arg1: i32) -> (i32, i32) {
    %c0_i32 = arith.constant 0 : i32
    %c0_i32_0 = arith.constant 0 : i32
    %c0_i32_1 = arith.constant 0 : i32
    return %c0_i32, %c0_i32_0 : i32, i32
  }
  func.func @transform_3(%arg0: i32, %arg1: i32) -> (i32, i32) {
    %c0_i32 = arith.constant 0 : i32
    %c0_i32_0 = arith.constant 0 : i32
    %c0_i32_1 = arith.constant 0 : i32
    return %c0_i32, %c0_i32_0 : i32, i32
  }
  func.func @transform_4(%arg0: i32, %arg1: i32) -> i32 {
    %c0_i32 = arith.constant 0 : i32
    %c0_i32_0 = arith.constant 0 : i32
    return %c0_i32 : i32
  }
  func.func @transform_5(%arg0: i32, %arg1: i32) -> (i32, i32) {
    %c0_i32 = arith.constant 0 : i32
    %c0_i32_0 = arith.constant 0 : i32
    return %c0_i32, %arg0 : i32, i32
  }
}

</mosaic_0001>

<llo_original>
// kernel: tpu_custom_call.1
$region0: #{tpu_custom_call.1}
  #allocation0 [shape = 'u32[]', space=smem, size = 0x4, offset = 0x4, fixed_abs, tag = 'smem constant byte address 0x4 - core index']
  #allocation1 [shape = 'u32[144,128]{1,0:T(1,128)}', space=vmem, size = 0x12000, scoped, tag = 'internal scratch']
  #allocation2 [shape = 'f32[8,32]{1,0:T(8,128)}', space=vmem, size = 0x1000, scoped, tag = 'scratch operand']
  #allocation3 [shape = 'f32[1]{0:T(128)S(6)}', space=smem, size = 0x200, scoped, tag = 'scoped memory for tpu_custom_call.1']
  %s0 = inlined_call_operand.hbm [shape: f32[8,32], index: 0, kind: input, shape index: {}]
  %s1 = inlined_call_operand.hbm [shape: bf16[32,32], index: 1, kind: input, shape index: {}]
  %s2 = inlined_call_operand.vmem [shape: f32[1,32], index: 2, kind: input, shape index: {}]
  %s3 = inlined_call_operand.vmem [shape: f32[1,32], index: 3, kind: input, shape index: {}]
  %s4 = inlined_call_operand.<no memory space> [shape: f32[1], index: 4, kind: input, shape index: {}]
  %s5 = inlined_call_operand.hbm [shape: f32[1,8], index: 5, kind: output, shape index: {}]
  %s6 = sld [smem:[#allocation0]]
  $region46: #{tpu_custom_call.1} parent=0
    _
  %s8 = ssub.s32 1, %s6
  %s9 = scalar_select 0, %s8, %s6
  %10 = sst [smem:[#allocation3]] %s4
  $region1: #{tpu_custom_call.1} parent=0
    #allocation4 [shape = 'u8[4096]{0}', space=vmem, size = 0x1000, scoped, tag = 'input window, operand 0, single buffered']
    #allocation5 [shape = 's32[1]{0}', space=sflag, size = 0x4, scoped, tag = 'scoped memory for tpu_custom_call.1']
    #allocation6 [shape = 's32[1]{0}', space=sflag, size = 0x4, scoped, tag = 'scoped memory for tpu_custom_call.1']
    #allocation7 [shape = 'u8[8192]{0}', space=vmem, size = 0x2000, scoped, tag = 'input window, operand 1, single buffered']
    #allocation8 [shape = 's32[1]{0}', space=sflag, size = 0x4, scoped, tag = 'scoped memory for tpu_custom_call.1']
    #allocation9 [shape = 'u8[512]{0}', space=vmem, size = 0x400, scoped, tag = 'output window, operand 0, single buffered']
    %11 = vsyncpa [#allocation5], 0
    %12 = vsyncpa [#allocation8], 0
    %13 = vsyncpa [#allocation6], 0
    // Predicated region
    $region2: #{tpu_custom_call.1} parent=1 // pred_check
      _
    $region3: #{tpu_custom_call.1} parent=1 // pred_check_branch
      %15 = sbr.rel (0) target = $region5
    $region4: #{tpu_custom_call.1} parent=1 // pred_region
      %s17 = ssub.s32 128, 128
      %18 = vsyncadd [#allocation5], %s17
      %s20 = sshll.u32 [#allocation4], 4
      %s21 = int_to_ptr.vmem [resolvable:$true] %s20
      %23 = dma.hbm_to_vmem [thread:$0]  %s0, 128, %s21, [#allocation5]
    $region5: #{tpu_custom_call.1} parent=1 // pred_fallthru
      _
    // Predicated region
    $region6: #{tpu_custom_call.1} parent=1 // pred_check
      _
    $region7: #{tpu_custom_call.1} parent=1 // pred_check_branch
      %25 = sbr.rel (0) target = $region9
    $region8: #{tpu_custom_call.1} parent=1 // pred_region
      %s27 = ssub.s32 256, 256
      %28 = vsyncadd [#allocation8], %s27
      %s29 = sshll.u32 [#allocation7], 4
      %s30 = int_to_ptr.vmem [resolvable:$true] %s29
      %35 = dma.hbm_to_vmem [thread:$0]  %s1, 256, %s30, [#allocation8], 64, 64, 4
    $region9: #{tpu_custom_call.1} parent=1 // pred_fallthru
      _
    // Predicated region
    $region10: #{tpu_custom_call.1} parent=1 // pred_check
      _
    $region11: #{tpu_custom_call.1} parent=1 // pred_check_branch
      %37 = sbr.rel (0) target = $region13
    $region12: #{tpu_custom_call.1} parent=1 // pred_region
      _
    $region13: #{tpu_custom_call.1} parent=1 // pred_fallthru
      _
    // Predicated region
    $region14: #{tpu_custom_call.1} parent=1 // pred_check
      _
    $region15: #{tpu_custom_call.1} parent=1 // pred_check_branch
      %39 = sbr.rel (0) target = $region17
    $region16: #{tpu_custom_call.1} parent=1 // pred_region
      _
    $region17: #{tpu_custom_call.1} parent=1 // pred_fallthru
      _
    // Predicated region
    $region18: #{tpu_custom_call.1} parent=1 // pred_check
      _
    $region19: #{tpu_custom_call.1} parent=1 // pred_check_branch
      %41 = sbr.rel (0) target = $region21
    $region20: #{tpu_custom_call.1} parent=1 // pred_region
      _
    $region21: #{tpu_custom_call.1} parent=1 // pred_fallthru
      _
    // Predicated region
    $region22: #{tpu_custom_call.1} parent=1 // pred_check
      _
    $region23: #{tpu_custom_call.1} parent=1 // pred_check_branch
      %43 = sbr.rel (0) target = $region25
    $region24: #{tpu_custom_call.1} parent=1 // pred_region
      %44 = dma.done [#allocation5], 128
    $region25: #{tpu_custom_call.1} parent=1 // pred_fallthru
      _
    // Predicated region
    $region26: #{tpu_custom_call.1} parent=1 // pred_check
      _
    $region27: #{tpu_custom_call.1} parent=1 // pred_check_branch
      %46 = sbr.rel (0) target = $region29
    $region28: #{tpu_custom_call.1} parent=1 // pred_region
      %47 = dma.done [#allocation8], 256
    $region29: #{tpu_custom_call.1} parent=1 // pred_fallthru
      _
    %p49 = scmp.eq.s32.totalorder 0, 0
    // Predicated region
    $region30: #{tpu_custom_call.1} parent=1 // pred_check
      %p50 = pneg %p49
    $region31: #{tpu_custom_call.1} parent=1 // pred_check_branch
      %52 = sbr.rel (%p50) target = $region33
    $region32: #{tpu_custom_call.1} parent=1 // pred_region
      %vm53 = vcmask 261120
      %54 = vst.msk [vmem:[#allocation2] sm:$0xff] %vm53, 0.0
    $region33: #{tpu_custom_call.1} parent=1 // pred_fallthru
      _
    %v55 = vld [vmem:[#allocation2] sm:$0xff]
    %v56 = vld [vmem:[#allocation4] sm:$0xff]
    %v57 = vpack.c.bf16 %v56, %v56
    %v58 = vld [vmem:[#allocation7] sm:$0xf]
    %v59 = vld [vmem:[#allocation7 + $0x4] sm:$0xf]
    %v60 = vld [vmem:[#allocation7 + $0x8] sm:$0xf]
    %v61 = vld [vmem:[#allocation7 + $0xc] sm:$0xf]
    %v66 = vunpack.c.l.b16 %v58
    %v67 = vunpack.c.l.b16 %v59
    %v68 = vunpack.c.l.b16 %v60
    %v69 = vunpack.c.l.b16 %v61
    %v70 = vpack.c.b16 %v67, %v66
    %v71 = vpack.c.b16 %v69, %v68
    %vm74 = vcmask 261120
    %v76 = vsel %vm74, %v57, 0
    %78 = vmatprep.subr.bf16.mxu0 0
    %79 = vmatpush1.bf16.msra.mxu0 %v70
    %80 = vmatprep.subr.bf16.mxu0 0
    %81 = vmatpush1.bf16.msra.mxu0 %v71
    %82 = vmatprep.subr.bf16.mxu0 0
    %83 = vmatpush1.bf16.msra.mxu0 0
    %84 = vmatprep.subr.bf16.mxu0 0
    %85 = vmatpush1.bf16.msra.mxu0 0
    %86 = vmatprep.subr.bf16.mxu0 0
    %87 = vmatpush1.bf16.msra.mxu0 0
    %88 = vmatprep.subr.bf16.mxu0 0
    %89 = vmatpush1.bf16.msra.mxu0 0
    %90 = vmatprep.subr.bf16.mxu0 0
    %91 = vmatpush1.bf16.msra.mxu0 0
    %92 = vmatprep.subr.bf16.mxu0 0
    %93 = vmatpush1.bf16.msra.mxu0 0
    %94 = vmatprep.subr.bf16.mxu0 0
    %95 = vmatpush1.bf16.msra.mxu0 0
    %96 = vmatprep.subr.bf16.mxu0 0
    %97 = vmatpush1.bf16.msra.mxu0 0
    %98 = vmatprep.subr.bf16.mxu0 0
    %99 = vmatpush1.bf16.msra.mxu0 0
    %100 = vmatprep.subr.bf16.mxu0 0
    %101 = vmatpush1.bf16.msra.mxu0 0
    %102 = vmatprep.subr.bf16.mxu0 0
    %103 = vmatpush1.bf16.msra.mxu0 0
    %104 = vmatprep.subr.bf16.mxu0 0
    %105 = vmatpush1.bf16.msra.mxu0 0
    %106 = vmatprep.subr.bf16.mxu0 0
    %107 = vmatpush1.bf16.msra.mxu0 0
    %108 = vmatprep.subr.bf16.mxu0 0
    %109 = vmatpush1.bf16.msra.mxu0 0
    %110 = vmatprep.mubr.bf16.mxu0 0
    %111 = vmatmul.mubr.bf16.gmra.mrb[0].mxu0 %v76
    %v112 = vpop.f32.mrb[0].mxu0
    %v113 = vadd.f32 0.0, %v112
    %v114 = vpop.f32.mrb[0].mxu0
    %v115 = vpop.f32.mrb[0].mxu0
    %v116 = vpop.f32.mrb[0].mxu0
    %117 = vdwg.mxu0
    %v118 = vadd.f32 %v55, %v113
    %119 = vst.msk [vmem:[#allocation2] sm:$0xff] %vm74, %v118
    // Predicated region
    $region34: #{tpu_custom_call.1} parent=1 // pred_check
      %p120 = pneg %p49
    $region35: #{tpu_custom_call.1} parent=1 // pred_check_branch
      %122 = sbr.rel (%p120) target = $region37
    $region36: #{tpu_custom_call.1} parent=1 // pred_region
      %v123 = vld [vmem:[#allocation2] sm:$0xff]
      %v124 = vld [vmem:[%s2] sm:$0x1]
      %v126 = vlaneseq
      %v127 = vshrl.u32 %v126, 7
      %v128 = vsub.s32 0, %v127
      %v129 = vrot.slane %v124, %v128
      %v131 = vadd.f32 %v123, %v129
      %v132 = vmax.f32 %v131, 0.0
      %v133 = vld [vmem:[%s3] sm:$0x1]
      %v135 = vlaneseq
      %v136 = vshrl.u32 %v135, 7
      %v137 = vsub.s32 0, %v136
      %v138 = vrot.slane %v133, %v137
      %v140 = vmul.f32 %v132, %v138
      %v141 = vsel %vm74, %v140, 0.0
      %142 = vadd.xlane.f32.xlu0 %v141
      %v143 = vpop.xlane.xlu0 %142
      %144 = vxpose.xlu0.b32.start [1/16] %v143, 128
      %145 = vxpose.xlu0.b32.cont [2/16] 0.0, 128
      %146 = vxpose.xlu0.b32.cont [3/16] 0.0, 128
      %147 = vxpose.xlu0.b32.cont [4/16] 0.0, 128
      %148 = vxpose.xlu0.b32.cont [5/16] 0.0, 128
      %149 = vxpose.xlu0.b32.cont [6/16] 0.0, 128
      %150 = vxpose.xlu0.b32.cont [7/16] 0.0, 128
      %151 = vxpose.xlu0.b32.cont [8/16] 0.0, 128
      %152 = vxpose.xlu0.b32.cont [9/16] 0.0, 128
      %153 = vxpose.xlu0.b32.cont [10/16] 0.0, 128
      %154 = vxpose.xlu0.b32.cont [11/16] 0.0, 128
      %155 = vxpose.xlu0.b32.cont [12/16] 0.0, 128
      %156 = vxpose.xlu0.b32.cont [13/16] 0.0, 128
      %157 = vxpose.xlu0.b32.cont [14/16] 0.0, 128
      %158 = vxpose.xlu0.b32.cont [15/16] 0.0, 128
      %159 = vxpose.xlu0.b32.end [16/16] 0.0, 128
      %v160 = vpop.trf.xlu0
      %v161 = vpop.trf.xlu0
      %v162 = vpop.trf.xlu0
      %v163 = vpop.trf.xlu0
      %v164 = vpop.trf.xlu0
      %v165 = vpop.trf.xlu0
      %v166 = vpop.trf.xlu0
      %v167 = vpop.trf.xlu0
      %v168 = vpop.trf.xlu0
      %v169 = vpop.trf.xlu0
      %v170 = vpop.trf.xlu0
      %v171 = vpop.trf.xlu0
      %v172 = vpop.trf.xlu0
      %v173 = vpop.trf.xlu0
      %v174 = vpop.trf.xlu0
      %v175 = vpop.trf.xlu0
      %s176 = sld [smem:[#allocation3]]
      %v177 = vstv %s176
      %v178 = vadd.f32 %v160, %v177
      %v179 = vmul.f32 %v178, 0.5
      %v180 = vtanh.pop %v179
      %v181 = vmul.f32 %v180, 0.5
      %v182 = vadd.f32 %v181, 0.5
      %vm183 = vcmask 57344
      %184 = vst.msk [vmem:[#allocation9] sm:$0x1] %vm183, %v182
    $region37: #{tpu_custom_call.1} parent=1 // pred_fallthru
      _
    // Predicated region
    $region38: #{tpu_custom_call.1} parent=1 // pred_check
      _
    $region39: #{tpu_custom_call.1} parent=1 // pred_check_branch
      %186 = sbr.rel (0) target = $region41
    $region40: #{tpu_custom_call.1} parent=1 // pred_region
      %s188 = ssub.s32 16, 16
      %189 = vsyncadd [#allocation6], %s188
      %s191 = sshll.u32 [#allocation9], 4
      %s192 = int_to_ptr.vmem [resolvable:$true] %s191
      %194 = dma.vmem_to_hbm [thread:$0]  %s192, 16, %s5, [#allocation6]
    $region41: #{tpu_custom_call.1} parent=1 // pred_fallthru
      _
    // Predicated region
    $region42: #{tpu_custom_call.1} parent=1 // pred_check
      _
    $region43: #{tpu_custom_call.1} parent=1 // pred_check_branch
      %196 = sbr.rel (0) target = $region45
    $region44: #{tpu_custom_call.1} parent=1 // pred_region
      %197 = dma.done [#allocation6], 16
    $region45: #{tpu_custom_call.1} parent=1 // pred_fallthru
      _
    %198 = vsyncpa [#allocation5], 1
    %199 = vsyncpa [#allocation8], 1
    %200 = vsyncpa [#allocation6], 1

// kernel: tpu_custom_call.1
$region0: #{tpu_custom_call.1}
  #allocation0 [shape = 'u32[]', space=smem, size = 0x4, offset = 0x4, fixed_abs, tag = 'smem constant byte address 0x4 - core index']
  #allocation1 [shape = 'u32[144,128]{1,0:T(1,128)}', space=vmem, size = 0x12000, scoped, tag = 'internal scratch']
  #allocation2 [shape = 'f32[8,32]{1,0:T(8,128)}', space=vmem, size = 0x1000, scoped, tag = 'scratch operand']
  #allocation3 [shape = 'f32[1]{0:T(128)S(6)}', space=smem, size = 0x200, scoped, tag = 'scoped memory for tpu_custom_call.1']
  %s0 = inlined_call_operand.hbm [shape: f32[8,32], index: 0, kind: input, shape index: {}]
  %s1 = inlined_call_operand.hbm [shape: bf16[32,32], index: 1, kind: input, shape index: {}]
  %s2 = inlined_call_operand.vmem [shape: f32[1,32], index: 2, kind: input, shape index: {}]
  %s3 = inlined_call_operand.vmem [shape: f32[1,32], index: 3, kind: input, shape index: {}]
  %s4 = inlined_call_operand.<no memory space> [shape: f32[1], index: 4, kind: input, shape index: {}]
  %s5 = inlined_call_operand.hbm [shape: f32[1,8], index: 5, kind: output, shape index: {}]
  %s6 = sld [smem:[#allocation0]]
  $region46: #{tpu_custom_call.1} parent=0
    _
  %s8 = ssub.s32 1, %s6
  %s9 = scalar_select 0, %s8, %s6
  %10 = sst [smem:[#allocation3]] %s4
  $region1: #{tpu_custom_call.1} parent=0
    #allocation4 [shape = 'u8[4096]{0}', space=vmem, size = 0x1000, scoped, tag = 'input window, operand 0, single buffered']
    #allocation5 [shape = 's32[1]{0}', space=sflag, size = 0x4, scoped, tag = 'scoped memory for tpu_custom_call.1']
    #allocation6 [shape = 's32[1]{0}', space=sflag, size = 0x4, scoped, tag = 'scoped memory for tpu_custom_call.1']
    #allocation7 [shape = 'u8[8192]{0}', space=vmem, size = 0x2000, scoped, tag = 'input window, operand 1, single buffered']
    #allocation8 [shape = 's32[1]{0}', space=sflag, size = 0x4, scoped, tag = 'scoped memory for tpu_custom_call.1']
    #allocation9 [shape = 'u8[512]{0}', space=vmem, size = 0x400, scoped, tag = 'output window, operand 0, single buffered']
    %11 = vsyncpa [#allocation5], 0
    %12 = vsyncpa [#allocation8], 0
    %13 = vsyncpa [#allocation6], 0
    // Predicated region
    $region2: #{tpu_custom_call.1} parent=1 // pred_check
      _
    $region3: #{tpu_custom_call.1} parent=1 // pred_check_branch
      %15 = sbr.rel (0) target = $region5
    $region4: #{tpu_custom_call.1} parent=1 // pred_region
      %s17 = ssub.s32 128, 128
      %18 = vsyncadd [#allocation5], %s17
      %s20 = sshll.u32 [#allocation4], 4
      %s21 = int_to_ptr.vmem [resolvable:$true] %s20
      %23 = dma.hbm_to_vmem [thread:$0]  %s0, 128, %s21, [#allocation5]
    $region5: #{tpu_custom_call.1} parent=1 // pred_fallthru
      _
    // Predicated region
    $region6: #{tpu_custom_call.1} parent=1 // pred_check
      _
    $region7: #{tpu_custom_call.1} parent=1 // pred_check_branch
      %25 = sbr.rel (0) target = $region9
    $region8: #{tpu_custom_call.1} parent=1 // pred_region
      %s27 = ssub.s32 256, 256
      %28 = vsyncadd [#allocation8], %s27
      %s29 = sshll.u32 [#allocation7], 4
      %s30 = int_to_ptr.vmem [resolvable:$true] %s29
      %35 = dma.hbm_to_vmem [thread:$0]  %s1, 256, %s30, [#allocation8], 64, 64, 4
    $region9: #{tpu_custom_call.1} parent=1 // pred_fallthru
      _
    // Predicated region
    $region10: #{tpu_custom_call.1} parent=1 // pred_check
      _
    $region11: #{tpu_custom_call.1} parent=1 // pred_check_branch
      %37 = sbr.rel (0) target = $region13
    $region12: #{tpu_custom_call.1} parent=1 // pred_region
      _
    $region13: #{tpu_custom_call.1} parent=1 // pred_fallthru
      _
    // Predicated region
    $region14: #{tpu_custom_call.1} parent=1 // pred_check
      _
    $region15: #{tpu_custom_call.1} parent=1 // pred_check_branch
      %39 = sbr.rel (0) target = $region17
    $region16: #{tpu_custom_call.1} parent=1 // pred_region
      _
    $region17: #{tpu_custom_call.1} parent=1 // pred_fallthru
      _
    // Predicated region
    $region18: #{tpu_custom_call.1} parent=1 // pred_check
      _
    $region19: #{tpu_custom_call.1} parent=1 // pred_check_branch
      %41 = sbr.rel (0) target = $region21
    $region20: #{tpu_custom_call.1} parent=1 // pred_region
      _
    $region21: #{tpu_custom_call.1} parent=1 // pred_fallthru
      _
    // Predicated region
    $region22: #{tpu_custom_call.1} parent=1 // pred_check
      _
    $region23: #{tpu_custom_call.1} parent=1 // pred_check_branch
      %43 = sbr.rel (0) target = $region25
    $region24: #{tpu_custom_call.1} parent=1 // pred_region
      %44 = dma.done [#allocation5], 128
    $region25: #{tpu_custom_call.1} parent=1 // pred_fallthru
      _
    // Predicated region
    $region26: #{tpu_custom_call.1} parent=1 // pred_check
      _
    $region27: #{tpu_custom_call.1} parent=1 // pred_check_branch
      %46 = sbr.rel (0) target = $region29
    $region28: #{tpu_custom_call.1} parent=1 // pred_region
      %47 = dma.done [#allocation8], 256
    $region29: #{tpu_custom_call.1} parent=1 // pred_fallthru
      _
    %p49 = scmp.eq.s32.totalorder 0, 0
    // Predicated region
    $region30: #{tpu_custom_call.1} parent=1 // pred_check
      %p50 = pneg %p49
    $region31: #{tpu_custom_call.1} parent=1 // pred_check_branch
      %52 = sbr.rel (%p50) target = $region33
    $region32: #{tpu_custom_call.1} parent=1 // pred_region
      %vm53 = vcmask 261120
      %54 = vst.msk [vmem:[#allocation2] sm:$0xff] %vm53, 0.0
    $region33: #{tpu_custom_call.1} parent=1 // pred_fallthru
      _
    %v55 = vld [vmem:[#allocation2] sm:$0xff]
    %v56 = vld [vmem:[#allocation4] sm:$0xff]
    %v57 = vpack.c.bf16 %v56, %v56
    %v58 = vld [vmem:[#allocation7] sm:$0xf]
    %v59 = vld [vmem:[#allocation7 + $0x4] sm:$0xf]
    %v60 = vld [vmem:[#allocation7 + $0x8] sm:$0xf]
    %v61 = vld [vmem:[#allocation7 + $0xc] sm:$0xf]
    %v66 = vunpack.c.l.b16 %v58
    %v67 = vunpack.c.l.b16 %v59
    %v68 = vunpack.c.l.b16 %v60
    %v69 = vunpack.c.l.b16 %v61
    %v70 = vpack.c.b16 %v67, %v66
    %v71 = vpack.c.b16 %v69, %v68
    %vm74 = vcmask 261120
    %v76 = vsel %vm74, %v57, 0
    %78 = vmatprep.subr.bf16.mxu0 0
    %79 = vmatpush1.bf16.msra.mxu0 %v70
    %80 = vmatprep.subr.bf16.mxu0 0
    %81 = vmatpush1.bf16.msra.mxu0 %v71
    %82 = vmatprep.subr.bf16.mxu0 0
    %83 = vmatpush1.bf16.msra.mxu0 0
    %84 = vmatprep.subr.bf16.mxu0 0
    %85 = vmatpush1.bf16.msra.mxu0 0
    %86 = vmatprep.subr.bf16.mxu0 0
    %87 = vmatpush1.bf16.msra.mxu0 0
    %88 = vmatprep.subr.bf16.mxu0 0
    %89 = vmatpush1.bf16.msra.mxu0 0
    %90 = vmatprep.subr.bf16.mxu0 0
    %91 = vmatpush1.bf16.msra.mxu0 0
    %92 = vmatprep.subr.bf16.mxu0 0
    %93 = vmatpush1.bf16.msra.mxu0 0
    %94 = vmatprep.subr.bf16.mxu0 0
    %95 = vmatpush1.bf16.msra.mxu0 0
    %96 = vmatprep.subr.bf16.mxu0 0
    %97 = vmatpush1.bf16.msra.mxu0 0
    %98 = vmatprep.subr.bf16.mxu0 0
    %99 = vmatpush1.bf16.msra.mxu0 0
    %100 = vmatprep.subr.bf16.mxu0 0
    %101 = vmatpush1.bf16.msra.mxu0 0
    %102 = vmatprep.subr.bf16.mxu0 0
    %103 = vmatpush1.bf16.msra.mxu0 0
    %104 = vmatprep.subr.bf16.mxu0 0
    %105 = vmatpush1.bf16.msra.mxu0 0
    %106 = vmatprep.subr.bf16.mxu0 0
    %107 = vmatpush1.bf16.msra.mxu0 0
    %108 = vmatprep.subr.bf16.mxu0 0
    %109 = vmatpush1.bf16.msra.mxu0 0
    %110 = vmatprep.mubr.bf16.mxu0 0
    %111 = vmatmul.mubr.bf16.gmra.mrb[0].mxu0 %v76
    %v112 = vpop.f32.mrb[0].mxu0
    %v113 = vadd.f32 0.0, %v112
    %v114 = vpop.f32.mrb[0].mxu0
    %v115 = vpop.f32.mrb[0].mxu0
    %v116 = vpop.f32.mrb[0].mxu0
    %117 = vdwg.mxu0
    %v118 = vadd.f32 %v55, %v113
    %119 = vst.msk [vmem:[#allocation2] sm:$0xff] %vm74, %v118
    // Predicated region
    $region34: #{tpu_custom_call.1} parent=1 // pred_check
      %p120 = pneg %p49
    $region35: #{tpu_custom_call.1} parent=1 // pred_check_branch
      %122 = sbr.rel (%p120) target = $region37
    $region36: #{tpu_custom_call.1} parent=1 // pred_region
      %v123 = vld [vmem:[#allocation2] sm:$0xff]
      %v124 = vld [vmem:[%s2] sm:$0x1]
      %v126 = vlaneseq
      %v127 = vshrl.u32 %v126, 7
      %v128 = vsub.s32 0, %v127
      %v129 = vrot.slane %v124, %v128
      %v131 = vadd.f32 %v123, %v129
      %v132 = vmax.f32 %v131, 0.0
      %v133 = vld [vmem:[%s3] sm:$0x1]
      %v135 = vlaneseq
      %v136 = vshrl.u32 %v135, 7
      %v137 = vsub.s32 0, %v136
      %v138 = vrot.slane %v133, %v137
      %v140 = vmul.f32 %v132, %v138
      %v141 = vsel %vm74, %v140, 0.0
      %142 = vadd.xlane.f32.xlu0 %v141
      %v143 = vpop.xlane.xlu0 %142
      %144 = vxpose.xlu0.b32.start [1/16] %v143, 128
      %145 = vxpose.xlu0.b32.cont [2/16] 0.0, 128
      %146 = vxpose.xlu0.b32.cont [3/16] 0.0, 128
      %147 = vxpose.xlu0.b32.cont [4/16] 0.0, 128
      %148 = vxpose.xlu0.b32.cont [5/16] 0.0, 128
      %149 = vxpose.xlu0.b32.cont [6/16] 0.0, 128
      %150 = vxpose.xlu0.b32.cont [7/16] 0.0, 128
      %151 = vxpose.xlu0.b32.cont [8/16] 0.0, 128
      %152 = vxpose.xlu0.b32.cont [9/16] 0.0, 128
      %153 = vxpose.xlu0.b32.cont [10/16] 0.0, 128
      %154 = vxpose.xlu0.b32.cont [11/16] 0.0, 128
      %155 = vxpose.xlu0.b32.cont [12/16] 0.0, 128
      %156 = vxpose.xlu0.b32.cont [13/16] 0.0, 128
      %157 = vxpose.xlu0.b32.cont [14/16] 0.0, 128
      %158 = vxpose.xlu0.b32.cont [15/16] 0.0, 128
      %159 = vxpose.xlu0.b32.end [16/16] 0.0, 128
      %v160 = vpop.trf.xlu0
      %v161 = vpop.trf.xlu0
      %v162 = vpop.trf.xlu0
      %v163 = vpop.trf.xlu0
      %v164 = vpop.trf.xlu0
      %v165 = vpop.trf.xlu0
      %v166 = vpop.trf.xlu0
      %v167 = vpop.trf.xlu0
      %v168 = vpop.trf.xlu0
      %v169 = vpop.trf.xlu0
      %v170 = vpop.trf.xlu0
      %v171 = vpop.trf.xlu0
      %v172 = vpop.trf.xlu0
      %v173 = vpop.trf.xlu0
      %v174 = vpop.trf.xlu0
      %v175 = vpop.trf.xlu0
      %s176 = sld [smem:[#allocation3]]
      %v177 = vstv %s176
      %v178 = vadd.f32 %v160, %v177
      %v179 = vmul.f32 %v178, 0.5
      %v180 = vtanh.pop %v179
      %v181 = vmul.f32 %v180, 0.5
      %v182 = vadd.f32 %v181, 0.5
      %vm183 = vcmask 57344
      %184 = vst.msk [vmem:[#allocation9] sm:$0x1] %vm183, %v182
    $region37: #{tpu_custom_call.1} parent=1 // pred_fallthru
      _
    // Predicated region
    $region38: #{tpu_custom_call.1} parent=1 // pred_check
      _
    $region39: #{tpu_custom_call.1} parent=1 // pred_check_branch
      %186 = sbr.rel (0) target = $region41
    $region40: #{tpu_custom_call.1} parent=1 // pred_region
      %s188 = ssub.s32 16, 16
      %189 = vsyncadd [#allocation6], %s188
      %s191 = sshll.u32 [#allocation9], 4
      %s192 = int_to_ptr.vmem [resolvable:$true] %s191
      %194 = dma.vmem_to_hbm [thread:$0]  %s192, 16, %s5, [#allocation6]
    $region41: #{tpu_custom_call.1} parent=1 // pred_fallthru
      _
    // Predicated region
    $region42: #{tpu_custom_call.1} parent=1 // pred_check
      _
    $region43: #{tpu_custom_call.1} parent=1 // pred_check_branch
      %196 = sbr.rel (0) target = $region45
    $region44: #{tpu_custom_call.1} parent=1 // pred_region
      %197 = dma.done [#allocation6], 16
    $region45: #{tpu_custom_call.1} parent=1 // pred_fallthru
      _
    %198 = vsyncpa [#allocation5], 1
    %199 = vsyncpa [#allocation8], 1
    %200 = vsyncpa [#allocation6], 1

</llo_original>
